<compile_context>
chip_gen: v7x
topology: tpu7x:2x2x1
jax: 0.10.0
libtpu: 0.0.40
codegen_flags: <defaults>
</compile_context>

<pallas_src>
import math
import functools

import jax
import jax.numpy as jnp
from jax.experimental import pallas as pl
from jax.experimental.pallas import tpu as pltpu


DEQ_BLOCK = 128


def _pick_tile(n, candidates):
    for c in candidates:
        if n % c == 0:
            return c
    raise ValueError(f"no tile in {candidates} divides {n}")


# -----------------------------------------------------------------------------
# 1) Standalone deepseek_v3_dequantization (engine weight-loading path / check).
#    Flat 1-D SMEM scale + 2-D (row-block, col-superblock) grid.
# -----------------------------------------------------------------------------
def _dequant_kernel(scale_ref, w_ref, out_ref, *, nbc, cblk, bc):
    i = pl.program_id(0)      # 128-row block index
    j = pl.program_id(1)      # column super-block index
    for jb in range(cblk):    # static unroll over 128-wide column blocks
        s = scale_ref[i * nbc + j * cblk + jb]          # scalar from 1-D SMEM
        c0 = jb * bc
        out_ref[:, c0:c0 + bc] = (
            w_ref[:, c0:c0 + bc].astype(jnp.float32) * s
        ).astype(out_ref.dtype)


def deepseek_v3_dequantization(weight_q, weight_scale_inv, block_size=(DEQ_BLOCK, DEQ_BLOCK)):
    rows, cols = weight_q.shape
    br, bc = block_size
    # TODO(synk): ragged (non-multiple-of-128) tails would need masked tail blocks.
    assert rows % br == 0 and cols % bc == 0
    nbr, nbc = rows // br, cols // bc
    assert weight_scale_inv.shape == (nbr, nbc)
    csuper = _pick_tile(cols, (1024, 512, 256, 128))
    cblk = csuper // bc
    scale_flat = weight_scale_inv.reshape(-1).astype(jnp.float32)
    kernel = functools.partial(_dequant_kernel, nbc=nbc, cblk=cblk, bc=bc)
    return pl.pallas_call(
        kernel,
        out_shape=jax.ShapeDtypeStruct((rows, cols), jnp.bfloat16),
        grid=(nbr, cols // csuper),
        in_specs=[
            pl.BlockSpec(memory_space=pltpu.MemorySpace.SMEM),   # flat scales
            pl.BlockSpec((br, csuper), lambda i, j: (i, j)),
        ],
        out_specs=pl.BlockSpec((br, csuper), lambda i, j: (i, j)),
        compiler_params=pltpu.CompilerParams(
            dimension_semantics=("parallel", "parallel")),
    )(scale_flat, weight_q)


# -----------------------------------------------------------------------------
# 2) Fused dequant + matmul: activations (bf16) @ quantized-weight, with the
#    128x128 block scale applied to the weight tile in-kernel (no bf16 weight
#    materialization in HBM).  f32 VMEM accumulator, K reduction last.
# -----------------------------------------------------------------------------
def _matmul_dequant_kernel(a_ref, w_ref, scale_ref, o_ref, acc_ref, *, tk):
    k_idx = pl.program_id(2)

    @pl.when(k_idx == 0)
    def _():
        acc_ref[...] = jnp.zeros_like(acc_ref)

    n_sub = tk // DEQ_BLOCK
    for kb in range(n_sub):                     # static unroll over 128-deep slabs
        row = k_idx * n_sub + kb                # absolute 128-row scale block
        srow = scale_ref[pl.ds(row, 1), :]      # (1, tn) f32 per-column-block scale
        # In-register dequant (fp32 multiply -> bf16 cast), matching the
        # reference dequantization semantics exactly.
        b = (w_ref[kb * DEQ_BLOCK:(kb + 1) * DEQ_BLOCK, :].astype(jnp.float32)
             * srow).astype(jnp.bfloat16)
        acc_ref[...] += jnp.dot(
            a_ref[:, kb * DEQ_BLOCK:(kb + 1) * DEQ_BLOCK], b,
            preferred_element_type=jnp.float32)

    @pl.when(k_idx == pl.num_programs(2) - 1)
    def _():
        o_ref[...] = acc_ref[...].astype(o_ref.dtype)


def matmul_dequant_bf16(a, w_q, scale_col_exp, *, tm=None, tn=None, tk=None,
                        out_dtype=jnp.bfloat16):
    """a: (M, K) bf16.  w_q: (K, N) quantized payload.  scale_col_exp: (K/128, N) f32
    (per-128x128-block scale, pre-expanded along columns — tiny vs the weight).
    TODO(synk): on v7x, feed fp8 payloads straight to the MXU instead of the
    in-kernel bf16 dequant multiply."""
    M, K = a.shape
    K2, N = w_q.shape
    assert K == K2 and K % DEQ_BLOCK == 0
    assert scale_col_exp.shape == (K // DEQ_BLOCK, N)
    tm = tm or _pick_tile(M, (512, 256, 128))
    tn = tn or _pick_tile(N, (256, 128))
    tk = tk or _pick_tile(K, (512, 384, 256, 128))
    assert M % tm == 0 and N % tn == 0 and K % tk == 0 and tk % DEQ_BLOCK == 0
    kernel = functools.partial(_matmul_dequant_kernel, tk=tk)
    bytes_accessed = (a.size * 2 + w_q.size * w_q.dtype.itemsize
                      + scale_col_exp.size * 4 + M * N * 2)
    return pl.pallas_call(
        kernel,
        out_shape=jax.ShapeDtypeStruct((M, N), out_dtype),
        grid=(M // tm, N // tn, K // tk),
        in_specs=[
            pl.BlockSpec((tm, tk), lambda i, j, k: (i, k)),
            pl.BlockSpec((tk, tn), lambda i, j, k: (k, j)),
            # full scale stripe for this column block (first dim == full dim)
            pl.BlockSpec((K // DEQ_BLOCK, tn), lambda i, j, k: (0, j)),
        ],
        out_specs=pl.BlockSpec((tm, tn), lambda i, j, k: (i, j)),
        scratch_shapes=[pltpu.VMEM((tm, tn), jnp.float32)],
        compiler_params=pltpu.CompilerParams(
            dimension_semantics=("parallel", "parallel", "arbitrary")),
        cost_estimate=pl.CostEstimate(flops=2 * M * N * K, transcendentals=0,
                                      bytes_accessed=int(bytes_accessed)),
    )(a, w_q, scale_col_exp)


# -----------------------------------------------------------------------------
# 3) Flash attention with fused RoPE, per-head grid axis, causal DMA clamp,
#    diagonal-only masking.  Reads q/k/v directly out of the fused (B,S,3D)
#    QKV activation via column-block index_maps; writes (B,S,D) directly.
# -----------------------------------------------------------------------------
def _flash_rope_kernel(q_ref, k_ref, v_ref, cq_ref, sq_ref, ck_ref, sk_ref,
                       o_ref, qrot_sc, m_sc, l_sc, acc_sc, *, tq, tkv, half):
    qi = pl.program_id(2)
    ki = pl.program_id(3)

    @pl.when(ki == 0)
    def _():
        # Rotate + scale q once per q tile (cos_q/sin_q already include
        # 1/sqrt(hd) and the rotate_half sign).
        q = q_ref[0].astype(jnp.float32)                              # (tq, hd)
        q_rot = q * cq_ref[...] + pltpu.roll(q, shift=half, axis=1) * sq_ref[...]
        qrot_sc[...] = q_rot.astype(qrot_sc.dtype)
        m_sc[...] = jnp.full_like(m_sc, -jnp.inf)
        l_sc[...] = jnp.zeros_like(l_sc)
        acc_sc[...] = jnp.zeros_like(acc_sc)

    def _update(s, vv):
        m_prev = m_sc[...]                                            # (tq, 128)
        m_new = jnp.maximum(m_prev, jnp.max(s, axis=-1, keepdims=True))
        alpha = jnp.exp(m_prev - m_new)
        p = jnp.exp(s - m_new[:, 0:1])                                # (tq, tkv)
        l_sc[...] = alpha * l_sc[...] + jnp.sum(p, axis=-1, keepdims=True)
        acc_sc[...] = alpha[:, 0:1] * acc_sc[...] + jnp.dot(
            p.astype(vv.dtype), vv, preferred_element_type=jnp.float32)
        m_sc[...] = m_new

    def _tile_body(apply_mask):
        def body():
            kk = k_ref[0].astype(jnp.float32)                         # (tkv, hd)
            k_rot = (kk * ck_ref[...] +
                     pltpu.roll(kk, shift=half, axis=1) * sk_ref[...]
                     ).astype(jnp.bfloat16)
            s = jax.lax.dot_general(
                qrot_sc[...], k_rot, (((1,), (1,)), ((), ())),
                preferred_element_type=jnp.float32)                   # (tq, tkv)
            if apply_mask:  # only tiles straddling the causal diagonal
                row = qi * tq + jax.lax.broadcasted_iota(jnp.int32, (tq, tkv), 0)
                col = ki * tkv + jax.lax.broadcasted_iota(jnp.int32, (tq, tkv), 1)
                s = jnp.where(row >= col, s, -1e30)
            _update(s, v_ref[0])
        return body

    fully_visible = ki * tkv + tkv - 1 <= qi * tq
    straddles = jnp.logical_and(ki * tkv < (qi + 1) * tq,
                                ki * tkv + tkv - 1 > qi * tq)
    pl.when(fully_visible)(_tile_body(False))
    pl.when(straddles)(_tile_body(True))

    @pl.when(ki == pl.num_programs(3) - 1)
    def _():
        inv_l = pl.reciprocal(l_sc[:, 0:1], approx=True)
        o_ref[0] = (acc_sc[...] * inv_l).astype(o_ref.dtype)


def flash_attention_rope(qkv, cos_q, sin_q, cos_k, sin_k, *, num_heads, head_dim,
                         tq=128, tkv=128):
    """qkv: (B, S, 3*H*hd) bf16 laid out as [q_h0..q_H-1 | k_h0.. | v_h0..].
    cos_q/sin_q already include the 1/sqrt(hd) scale; sin_* include the
    rotate_half sign.  Returns (B, S, H*hd)."""
    B, S, D3 = qkv.shape
    H, hd = num_heads, head_dim
    D = H * hd
    assert D3 == 3 * D and S % tq == 0 and S % tkv == 0 and hd % 2 == 0
    half = hd // 2

    def _clamp_kv(qi, ki):
        # Clamp kv block to the last causally-visible block so the DMA of
        # fully-future tiles is elided (compute for them is skipped anyway).
        return jnp.minimum(ki, ((qi + 1) * tq - 1) // tkv)

    q_spec = pl.BlockSpec((1, tq, hd), lambda b, h, qi, ki: (b, qi, h))
    k_spec = pl.BlockSpec((1, tkv, hd), lambda b, h, qi, ki: (b, _clamp_kv(qi, ki), H + h))
    v_spec = pl.BlockSpec((1, tkv, hd), lambda b, h, qi, ki: (b, _clamp_kv(qi, ki), 2 * H + h))
    cq_spec = pl.BlockSpec((tq, hd), lambda b, h, qi, ki: (qi, 0))
    ck_spec = pl.BlockSpec((tkv, hd), lambda b, h, qi, ki: (_clamp_kv(qi, ki), 0))
    o_spec = pl.BlockSpec((1, tq, hd), lambda b, h, qi, ki: (b, qi, h))

    kernel = functools.partial(_flash_rope_kernel, tq=tq, tkv=tkv, half=half)
    bytes_accessed = 2 * qkv.size * qkv.dtype.itemsize + B * S * D * 2 + 4 * S * hd * 4
    return pl.pallas_call(
        kernel,
        out_shape=jax.ShapeDtypeStruct((B, S, D), qkv.dtype),
        grid=(B, H, S // tq, S // tkv),
        in_specs=[q_spec, k_spec, v_spec, cq_spec, cq_spec, ck_spec, ck_spec],
        out_specs=o_spec,
        scratch_shapes=[
            pltpu.VMEM((tq, hd), jnp.bfloat16),    # rotated+scaled q tile
            pltpu.VMEM((tq, 128), jnp.float32),    # running max (lane-replicated)
            pltpu.VMEM((tq, 128), jnp.float32),    # running sum (lane-replicated)
            pltpu.VMEM((tq, hd), jnp.float32),     # output accumulator
        ],
        compiler_params=pltpu.CompilerParams(
            dimension_semantics=("parallel", "parallel", "parallel", "arbitrary")),
        cost_estimate=pl.CostEstimate(flops=2 * B * H * S * S * hd,
                                      transcendentals=B * H * S * S // 2,
                                      bytes_accessed=int(bytes_accessed)),
    )(qkv, qkv, qkv, cos_q, sin_q, cos_k, sin_k)


# -----------------------------------------------------------------------------
# Attn_Wrapper.forward (phase == 'prefill') equivalent
# -----------------------------------------------------------------------------
def attn_wrapper_prefill(hidden_states, attention_mask, position_ids,
                         wq_q, wk_q, wv_q, wo_q, sq, sk, sv, so,
                         *, num_heads, head_dim, rope_theta=10000.0,
                         tq=None, tkv=None):
    """Pallas equivalent of the prefill branch of Attn_Wrapper.forward.
    Weights are passed as quantized payloads + per-128x128-block inverse scales
    and dequantized INSIDE the projection matmuls.  Returns (out, None, None)."""
    del attention_mask  # TODO(synk): causal mask generated in-kernel; arbitrary
    # additive/padding masks would need to be streamed per (q, kv) tile.
    B, S, D = hidden_states.shape
    H, hd = num_heads, head_dim
    assert H * hd == D

    # Weight prep (once per layer load in the real engine): fuse QKV payloads
    # (narrow payload, not bf16) and build the tiny column-expanded scales.
    wqkv_q = jnp.concatenate([wq_q, wk_q, wv_q], axis=1)            # (D, 3D)
    sqkv_exp = jnp.repeat(jnp.concatenate([sq, sk, sv], axis=1),
                          DEQ_BLOCK, axis=1).astype(jnp.float32)    # (D/128, 3D)
    so_exp = jnp.repeat(so, DEQ_BLOCK, axis=1).astype(jnp.float32)  # (D/128, D)

    # RoPE tables; fold rotate_half sign into sin and 1/sqrt(hd) into the q copy.
    inv_freq = 1.0 / (rope_theta ** (jnp.arange(0, hd, 2, dtype=jnp.float32) / hd))
    freqs = position_ids.astype(jnp.float32)[:, None] * inv_freq[None, :]
    emb = jnp.concatenate([freqs, freqs], axis=-1)                  # (S, hd)
    cos = jnp.cos(emb)
    sin = jnp.sin(emb)
    sign = jnp.concatenate([-jnp.ones((hd // 2,), jnp.float32),
                            jnp.ones((hd // 2,), jnp.float32)])
    sin_signed = sin * sign[None, :]
    q_scale = 1.0 / math.sqrt(hd)
    cos_q, sin_q = cos * q_scale, sin_signed * q_scale
    cos_k, sin_k = cos, sin_signed

    # Fused QKV projection with in-kernel dequant (no bf16 weight in HBM).
    x2d = hidden_states.reshape(B * S, D)
    qkv = matmul_dequant_bf16(x2d, wqkv_q, sqkv_exp)                # (B*S, 3D)
    qkv = qkv.reshape(B, S, 3 * D)                                  # free reshape

    # Flash attention with fused RoPE + causal DMA clamp; writes (B, S, D).
    if tq is None:
        tq = 256 if S % 256 == 0 else 128
    if tkv is None:
        tkv = tq
    attn = flash_attention_rope(qkv, cos_q, sin_q, cos_k, sin_k,
                                num_heads=H, head_dim=hd, tq=tq, tkv=tkv)

    # Output projection (fused dequant again).
    out = matmul_dequant_bf16(attn.reshape(B * S, D), wo_q, so_exp).reshape(B, S, D)

    # TODO(synk): core_engine.kv_offload / clear_expert_buffer / weight-buffer
    # management / DynamicCache are host-side engine bookkeeping (no kernel).
    return (out, None, None)


# -----------------------------------------------------------------------------
# Plain-JAX references (validation only)
# -----------------------------------------------------------------------------
def _reference_dequant(w_q, scale, blk=DEQ_BLOCK):
    exp = jnp.repeat(jnp.repeat(scale, blk, axis=0), blk, axis=1)
    return (w_q.astype(jnp.float32) * exp).astype(jnp.bfloat16)


def _reference_attention(hidden, pos_ids, wq, wk, wv, wo, H, hd, theta=10000.0):
    B, S, D = hidden.shape
    hp = jax.lax.Precision.HIGHEST
    x = hidden.astype(jnp.float32)
    q = jnp.dot(x, wq.astype(jnp.float32), precision=hp)
    k = jnp.dot(x, wk.astype(jnp.float32), precision=hp)
    v = jnp.dot(x, wv.astype(jnp.float32), precision=hp)
    inv_freq = 1.0 / (theta ** (jnp.arange(0, hd, 2, dtype=jnp.float32) / hd))
    freqs = pos_ids.astype(jnp.float32)[:, None] * inv_freq[None, :]
    emb = jnp.concatenate([freqs, freqs], -1)
    cos, sin = jnp.cos(emb), jnp.sin(emb)

    def rope(t):  # (B, S, H, hd)
        t1, t2 = t[..., :hd // 2], t[..., hd // 2:]
        rot = jnp.concatenate([-t2, t1], -1)
        return t * cos[None, :, None, :] + rot * sin[None, :, None, :]

    q = jnp.transpose(rope(q.reshape(B, S, H, hd)), (0, 2, 1, 3))
    k = jnp.transpose(rope(k.reshape(B, S, H, hd)), (0, 2, 1, 3))
    v = jnp.transpose(v.reshape(B, S, H, hd), (0, 2, 1, 3))
    s = jnp.einsum('bhqd,bhkd->bhqk', q, k, precision=hp) / math.sqrt(hd)
    causal = jnp.where(jnp.arange(S)[:, None] >= jnp.arange(S)[None, :], 0.0, -1e30)
    p = jax.nn.softmax(s + causal, axis=-1)
    o = jnp.einsum('bhqk,bhkd->bhqd', p, v, precision=hp)
    o = jnp.transpose(o, (0, 2, 1, 3)).reshape(B, S, D)
    return jnp.dot(o, wo.astype(jnp.float32), precision=hp)


# -----------------------------------------------------------------------------
# Main
# -----------------------------------------------------------------------------
if __name__ == "__main__":
    B, S = 2, 512              # batch, seq
    H, HD = 2, 128             # heads, head_dim (lane-dense: HD == 128)
    D = H * HD                 # hidden = 256
    NB = D // DEQ_BLOCK        # 128x128 scale blocks per side

    key = jax.random.PRNGKey(0)
    ks = jax.random.split(key, 10)

    # "Quantized" weight payloads + per-block inverse scales (deterministic).
    # TODO(synk): fp8 (float8_e4m3fn) storage simulated with a bf16 payload.
    wq_q = (0.05 * jax.random.normal(ks[0], (D, D), jnp.float32)).astype(jnp.bfloat16)
    wk_q = (0.05 * jax.random.normal(ks[1], (D, D), jnp.float32)).astype(jnp.bfloat16)
    wv_q = (0.05 * jax.random.normal(ks[2], (D, D), jnp.float32)).astype(jnp.bfloat16)
    wo_q = (0.05 * jax.random.normal(ks[3], (D, D), jnp.float32)).astype(jnp.bfloat16)
    sq = jax.random.uniform(ks[4], (NB, NB), jnp.float32, 0.5, 1.5)
    sk = jax.random.uniform(ks[5], (NB, NB), jnp.float32, 0.5, 1.5)
    sv = jax.random.uniform(ks[6], (NB, NB), jnp.float32, 0.5, 1.5)
    so = jax.random.uniform(ks[7], (NB, NB), jnp.float32, 0.5, 1.5)

    # Standalone dequant kernel check (engine weight-loading path).
    wq_deq = deepseek_v3_dequantization(wq_q, sq)
    ref_wq = _reference_dequant(wq_q, sq)
    deq_err = float(jnp.max(jnp.abs(wq_deq.astype(jnp.float32) - ref_wq.astype(jnp.float32))))
    assert deq_err < 1e-6, f"dequant max_err={deq_err}"

    # Inputs.
    hidden_states = (0.1 * jax.random.normal(ks[8], (B, S, D), jnp.float32)).astype(jnp.bfloat16)
    position_ids = jnp.arange(S, dtype=jnp.int32)

    # Quick check of the fused dequant-matmul against dequant-then-matmul.
    x2d = hidden_states.reshape(B * S, D)
    y_fused = matmul_dequant_bf16(x2d, wq_q, jnp.repeat(sq, DEQ_BLOCK, axis=1))
    y_ref = jnp.dot(x2d.astype(jnp.float32), ref_wq.astype(jnp.float32),
                    precision=jax.lax.Precision.HIGHEST)
    mm_err = float(jnp.max(jnp.abs(y_fused.astype(jnp.float32) - y_ref)))
    assert mm_err < 5e-3, f"fused matmul max_err={mm_err}"

    # Full prefill path.
    attn_output, _, _ = attn_wrapper_prefill(
        hidden_states, None, position_ids,
        wq_q, wk_q, wv_q, wo_q, sq, sk, sv, so,
        num_heads=H, head_dim=HD)
    attn_output = jax.block_until_ready(attn_output)

    assert attn_output.shape == (B, S, D)
    assert attn_output.dtype == jnp.bfloat16
    out_f32 = attn_output.astype(jnp.float32)
    assert bool(jnp.all(jnp.isfinite(out_f32)))

    # End-to-end check against a plain-JAX f32 reference (loose tol: bf16 path).
    wq = _reference_dequant(wq_q, sq)
    wk = _reference_dequant(wk_q, sk)
    wv = _reference_dequant(wv_q, sv)
    wo = _reference_dequant(wo_q, so)
    ref = _reference_attention(hidden_states, position_ids, wq, wk, wv, wo, H, HD)
    max_err = float(jnp.max(jnp.abs(out_f32 - ref)))
    assert max_err < 3e-2, f"max_err={max_err}"

    print("KERNEL_OK")
</pallas_src>

<mosaic_0001>
module attributes {stable_mosaic.version = 11 : i64} {
  func.func @_dequant_kernel(%arg0: i32, %arg1: i32, %arg2: memref<4xf32, #tpu.memory_space<smem>>, %arg3: memref<128x256xbf16, #tpu.memory_space<vmem>>, %arg4: memref<128x256xbf16, #tpu.memory_space<vmem>>) attributes {dimension_semantics = [#tpu.dimension_semantics<parallel>, #tpu.dimension_semantics<parallel>], iteration_bounds = array<i64: 2, 1>, scalar_prefetch = 0 : i64, scratch_operands = 0 : i64, tpu.core_type = #tpu.core_type<tc>, window_params = [{transform_indices = @transform_0, window_bounds = array<i64: 4>}, {transform_indices = @transform_1, window_bounds = array<i64: 128, 256>}, {transform_indices = @transform_2, window_bounds = array<i64: 128, 256>}]} {
    %c2_i32 = arith.constant 2 : i32
    %0 = arith.muli %arg0, %c2_i32 : i32
    %c2_i32_0 = arith.constant 2 : i32
    %1 = arith.muli %arg1, %c2_i32_0 : i32
    %2 = arith.addi %0, %1 : i32
    %c0_i32 = arith.constant 0 : i32
    %3 = arith.addi %2, %c0_i32 : i32
    %4 = arith.index_cast %3 : i32 to index
    %5 = memref.load %arg2[%4] : memref<4xf32, #tpu.memory_space<smem>>
    %c0 = arith.constant 0 : index
    %c0_1 = arith.constant 0 : index
    %6 = vector.load %arg3[%c0, %c0_1] : memref<128x256xbf16, #tpu.memory_space<vmem>>, vector<128x128xbf16>
    %7 = arith.extf %6 : vector<128x128xbf16> to vector<128x128xf32>
    %8 = vector.broadcast %5 : f32 to vector<128x128xf32>
    %9 = arith.mulf %7, %8 : vector<128x128xf32>
    %10 = arith.truncf %9 : vector<128x128xf32> to vector<128x128xbf16>
    %c0_2 = arith.constant 0 : index
    %c0_3 = arith.constant 0 : index
    %11 = vector.load %arg4[%c0_2, %c0_3] : memref<128x256xbf16, #tpu.memory_space<vmem>>, vector<128x128xbf16>
    tpu.vector_store %arg4[%c0_2, %c0_3], %10 {strides = array<i32>} : memref<128x256xbf16, #tpu.memory_space<vmem>>, vector<128x128xbf16>,
    %c2_i32_4 = arith.constant 2 : i32
    %12 = arith.muli %arg0, %c2_i32_4 : i32
    %c2_i32_5 = arith.constant 2 : i32
    %13 = arith.muli %arg1, %c2_i32_5 : i32
    %14 = arith.addi %12, %13 : i32
    %c1_i32 = arith.constant 1 : i32
    %15 = arith.addi %14, %c1_i32 : i32
    %16 = arith.index_cast %15 : i32 to index
    %17 = memref.load %arg2[%16] : memref<4xf32, #tpu.memory_space<smem>>
    %c0_6 = arith.constant 0 : index
    %c128 = arith.constant 128 : index
    %18 = vector.load %arg3[%c0_6, %c128] : memref<128x256xbf16, #tpu.memory_space<vmem>>, vector<128x128xbf16>
    %19 = arith.extf %18 : vector<128x128xbf16> to vector<128x128xf32>
    %20 = vector.broadcast %17 : f32 to vector<128x128xf32>
    %21 = arith.mulf %19, %20 : vector<128x128xf32>
    %22 = arith.truncf %21 : vector<128x128xf32> to vector<128x128xbf16>
    %c0_7 = arith.constant 0 : index
    %c128_8 = arith.constant 128 : index
    %23 = vector.load %arg4[%c0_7, %c128_8] : memref<128x256xbf16, #tpu.memory_space<vmem>>, vector<128x128xbf16>
    tpu.vector_store %arg4[%c0_7, %c128_8], %22 {strides = array<i32>} : memref<128x256xbf16, #tpu.memory_space<vmem>>, vector<128x128xbf16>,
    return
  }
  func.func @transform_0(%arg0: i32, %arg1: i32) -> i32 {
    %c0_i32 = arith.constant 0 : i32
    %c0_i32_0 = arith.constant 0 : i32
    return %c0_i32 : i32
  }
  func.func @transform_1(%arg0: i32, %arg1: i32) -> (i32, i32) {
    %c0_i32 = arith.constant 0 : i32
    return %arg0, %arg1 : i32, i32
  }
  func.func @transform_2(%arg0: i32, %arg1: i32) -> (i32, i32) {
    %c0_i32 = arith.constant 0 : i32
    return %arg0, %arg1 : i32, i32
  }
}

</mosaic_0001>

<llo_original>
// kernel: tpu_custom_call.1
$region0: #{tpu_custom_call.1}
  #allocation0 [shape = 'u32[]', space=smem, size = 0x4, offset = 0x4, fixed_abs, tag = 'smem constant byte address 0x4 - core index']
  #allocation1 [shape = 'u32[144,128]{1,0:T(1,128)}', space=vmem, size = 0x12000, scoped, tag = 'internal scratch']
  %s0 = inlined_call_operand.hbm [shape: f32[4], index: 0, kind: input, shape index: {}]
  %s1 = inlined_call_operand.hbm [shape: bf16[256,256], index: 1, kind: input, shape index: {}]
  %s2 = inlined_call_operand.hbm [shape: bf16[256,256], index: 2, kind: output, shape index: {}]
  %s3 = sld [smem:[#allocation0]]
  $region49: #{tpu_custom_call.1} parent=0
    _
  %s5 = ssub.s32 1, %s3
  %s6 = scalar_select 0, %s5, %s3
  $region1: #{tpu_custom_call.1} parent=0
    #allocation2 [shape = 'u8[512]{0}', space=smem, size = 0x200, scoped, tag = 'input window, operand 0, single buffered']
    #allocation3 [shape = 's32[2]{0}', space=sflag, size = 0x8, scoped, tag = 'scoped memory for tpu_custom_call.1']
    #allocation4 [shape = 's32[2]{0}', space=sflag, size = 0x8, scoped, tag = 'scoped memory for tpu_custom_call.1']
    #allocation5 [shape = 's32[2]{0}', space=sflag, size = 0x8, scoped, tag = 'scoped memory for tpu_custom_call.1']
    #allocation6 [shape = 'u8[131072]{0}', space=vmem, size = 0x20000, scoped, tag = 'input window, operand 1']
    #allocation7 [shape = 'u8[131072]{0}', space=vmem, size = 0x20000, scoped, tag = 'output window, operand 0']
    %7 = vsyncpa [#allocation5], 0
    %8 = vsyncpa [#allocation3], 0
    %s9 = scalar_lea.sflag [#allocation3], 1
    %10 = vsyncpa %s9, 0
    %11 = vsyncpa [#allocation4], 0
    %s12 = scalar_lea.sflag [#allocation4], 1
    %13 = vsyncpa %s12, 0
    loop: start=0, step=1, limit=4
    $region2: #{tpu_custom_call.1} parent=1 // loop_pre_header
      _
    $region3: #{tpu_custom_call.1} parent=1 // loop_header
      %s15 = sphi 0, %s19
      %p16 = scmp.ge.s32.totalorder %s15, 4
      %s22 = sphi 0, %s34
      %s23 = sphi 0, %s30
      %s24 = sphi 0, %s22
      %s25 = sphi 0, %s23
      %s26 = sphi 0, %s24
      %s27 = sphi 0, %s25
      %s35 = sphi 0, %s35
      %s37 = sphi 0, %s35
      %s38 = sphi 0, %s37
      %s52 = sphi 0, %s38
      %s60 = sphi 0, %s62
      %s63 = sphi 0, %s60
      %s64 = sphi 0, %s63
      %s80 = sphi 0, %s64
      %s88 = sphi 0, %s90
      %s91 = sphi 0, %s88
      %s92 = sphi 0, %s91
      %s108 = sphi 0, %s92
    $region4: #{tpu_custom_call.1} parent=1 // loop_header_branch
      %18 = sbr.rel (%p16) target = $region8
    $region5: #{tpu_custom_call.1} parent=1 // loop_body
      %s20 = ssub.s32 %s15, 1
      %s21 = ssub.s32 %s15, 2
      %s28 = sadd.s32 1, %s23
      %p29 = scmp.ge.s32.totalorder %s28, 1
      %s30 = scalar_select %p29, 0, %s28
      %s31 = sadd.s32 1, %s22
      %s32 = scalar_select %p29, %s31, %s22
      %p33 = scmp.ge.s32.totalorder %s32, 2
      %s34 = scalar_select %p33, 0, %s32
      %s36 = sadd.s32 %s35, 1
      %p39 = scmp.eq.s32.totalorder %s15, 1
      %p40 = scmp.ne.s32.totalorder %s35, %s37
      %p41 = scmp.eq.s32.totalorder %s15, 0
      %p42 = por %p40, %p41
      %p43 = scmp.ne.s32.totalorder %s35, %s37
      %p44 = scmp.eq.s32.totalorder %s20, 1
      %p45 = por %p43, %p44
      %p46 = scmp.ne.s32.totalorder %s37, %s38
      %p47 = scmp.eq.s32.totalorder %s20, 0
      %p48 = por %p46, %p47
      %p49 = scmp.ne.s32.totalorder %s37, %s38
      %p50 = scmp.eq.s32.totalorder %s21, 1
      %p51 = por %p49, %p50
      %p53 = scmp.ne.s32.totalorder %s38, %s52
      %p54 = scmp.eq.s32.totalorder %s21, 0
      %p55 = por %p53, %p54
      %s56 = ssub.s32 %s22, %s34
      %s57 = ssub.s32 %s23, %s30
      %s58 = sor.u32 %s56, %s57
      %p59 = scmp.eq.s32.totalorder %s58, 0
      %s61 = sadd.s32 %s60, 1
      %s62 = scalar_select %p59, %s60, %s61
      %p65 = pneg %p59
      %p66 = scmp.eq.s32.totalorder %s15, 1
      %p67 = por %p65, %p66
      %p68 = scmp.ne.s32.totalorder %s60, %s63
      %p69 = scmp.eq.s32.totalorder %s15, 0
      %p70 = por %p68, %p69
      %p71 = scmp.ne.s32.totalorder %s60, %s63
      %p72 = scmp.eq.s32.totalorder %s20, 1
      %p73 = por %p71, %p72
      %p74 = scmp.ne.s32.totalorder %s63, %s64
      %p75 = scmp.eq.s32.totalorder %s20, 0
      %p76 = por %p74, %p75
      %p77 = scmp.ne.s32.totalorder %s63, %s64
      %p78 = scmp.eq.s32.totalorder %s21, 1
      %p79 = por %p77, %p78
      %p81 = scmp.ne.s32.totalorder %s64, %s80
      %p82 = scmp.eq.s32.totalorder %s21, 0
      %p83 = por %p81, %p82
      %s84 = ssub.s32 %s22, %s34
      %s85 = ssub.s32 %s23, %s30
      %s86 = sor.u32 %s84, %s85
      %p87 = scmp.eq.s32.totalorder %s86, 0
      %s89 = sadd.s32 %s88, 1
      %s90 = scalar_select %p87, %s88, %s89
      %p93 = pneg %p87
      %p94 = scmp.eq.s32.totalorder %s15, 1
      %p95 = por %p93, %p94
      %p96 = scmp.ne.s32.totalorder %s88, %s91
      %p97 = scmp.eq.s32.totalorder %s15, 0
      %p98 = por %p96, %p97
      %p99 = scmp.ne.s32.totalorder %s88, %s91
      %p100 = scmp.eq.s32.totalorder %s20, 1
      %p101 = por %p99, %p100
      %p102 = scmp.ne.s32.totalorder %s91, %s92
      %p103 = scmp.eq.s32.totalorder %s20, 0
      %p104 = por %p102, %p103
      %p105 = scmp.ne.s32.totalorder %s91, %s92
      %p106 = scmp.eq.s32.totalorder %s21, 1
      %p107 = por %p105, %p106
      %p109 = scmp.ne.s32.totalorder %s92, %s108
      %p110 = scmp.eq.s32.totalorder %s21, 0
      %p111 = por %p109, %p110
      %p112 = scmp.le.s32.totalorder 1, %s15
      %p113 = scmp.lt.s32.totalorder %s15, 3
      %p114 = pnand %p112, %p113
      %p115 = pneg %p114
      // Predicated region
      $region9: #{tpu_custom_call.1} parent=5 // pred_check
        _
      $region10: #{tpu_custom_call.1} parent=5 // pred_check_branch
        %117 = sbr.rel (%p114) target = $region12
      $region11: #{tpu_custom_call.1} parent=5 // pred_region
        %s118 = ssub.s32 %s15, 1
        // Predicated region
        $region13: #{tpu_custom_call.1} parent=11 // pred_check
          %p119 = pneg %p48
        $region14: #{tpu_custom_call.1} parent=11 // pred_check_branch
          %121 = sbr.rel (%p119) target = $region16
        $region15: #{tpu_custom_call.1} parent=11 // pred_region
          %s123 = ssub.s32 16, 16
          %124 = vsyncadd [#allocation5], %s123
          %127 = dma.hbm_to_smem %s0, 16, [#allocation2], [#allocation5]
        $region16: #{tpu_custom_call.1} parent=11 // pred_fallthru
          _
      $region12: #{tpu_custom_call.1} parent=5 // pred_fallthru
        _
      %p128 = scmp.lt.s32.totalorder %s15, 2
      // Predicated region
      $region17: #{tpu_custom_call.1} parent=5 // pred_check
        %p129 = pneg %p128
      $region18: #{tpu_custom_call.1} parent=5 // pred_check_branch
        %131 = sbr.rel (%p129) target = $region20
      $region19: #{tpu_custom_call.1} parent=5 // pred_region
        // Predicated region
        $region21: #{tpu_custom_call.1} parent=19 // pred_check
          %p132 = pneg %p70
        $region22: #{tpu_custom_call.1} parent=19 // pred_check_branch
          %134 = sbr.rel (%p132) target = $region24
        $region23: #{tpu_custom_call.1} parent=19 // pred_region
          %s135 = sand.u32 %s60, 1
          %s136 = scalar_lea.sflag [#allocation3], %s135
          %s137 = sand.u32 %s60, 1
          %s138 = smul.addr %s137, 128
          %s139 = scalar_lea.vmem [#allocation6], %s138
          %s140 = smul.u32 16, %s22
          %s141 = smul.u32 2, %s23
          %s143 = ssub.s32 2048, 2048
          %144 = vsyncadd %s136, %s143
          %s145 = smul.addr %s140, 2
          %s146 = sadd.s32 %s141, %s145
          %s147 = smul.addr %s146, 64
          %s148 = scalar_lea.hbm %s1, %s147
          %s149 = sshll.u32 %s139, 4
          %s150 = int_to_ptr.vmem [resolvable:$true] %s149
          %155 = dma.hbm_to_vmem [thread:$0]  %s148, 2048, %s150, %s136, 128, 128, 8
        $region24: #{tpu_custom_call.1} parent=19 // pred_fallthru
          _
      $region20: #{tpu_custom_call.1} parent=5 // pred_fallthru
        _
      %p156 = scmp.le.s32.totalorder 1, %s15
      %p157 = scmp.lt.s32.totalorder %s15, 3
      %p158 = pnand %p156, %p157
      %p159 = pneg %p158
      // Predicated region
      $region25: #{tpu_custom_call.1} parent=5 // pred_check
        _
      $region26: #{tpu_custom_call.1} parent=5 // pred_check_branch
        %161 = sbr.rel (%p158) target = $region28
      $region27: #{tpu_custom_call.1} parent=5 // pred_region
        %s162 = ssub.s32 %s15, 1
        // Predicated region
        $region29: #{tpu_custom_call.1} parent=27 // pred_check
          %p163 = pneg %p48
        $region30: #{tpu_custom_call.1} parent=27 // pred_check_branch
          %165 = sbr.rel (%p163) target = $region32
        $region31: #{tpu_custom_call.1} parent=27 // pred_region
          %166 = dma.done [#allocation5], 16
        $region32: #{tpu_custom_call.1} parent=27 // pred_fallthru
          _
        %s167 = sand.u32 %s63, 1
        %s168 = scalar_lea.sflag [#allocation3], %s167
        %s169 = sand.u32 %s63, 1
        %s170 = smul.addr %s169, 128
        %s171 = scalar_lea.vmem [#allocation6], %s170
        // Predicated region
        $region33: #{tpu_custom_call.1} parent=27 // pred_check
          %p172 = pneg %p76
        $region34: #{tpu_custom_call.1} parent=27 // pred_check_branch
          %174 = sbr.rel (%p172) target = $region36
        $region35: #{tpu_custom_call.1} parent=27 // pred_region
          %175 = dma.done %s168, 2048
        $region36: #{tpu_custom_call.1} parent=27 // pred_fallthru
          _
        %176 = sfence
        %p177 = pneg %p48
        %p178 = pneg %p45
        %s179 = sand.u32 %s63, 1
        %s180 = scalar_lea.sflag [#allocation3], %s179
        %s181 = sand.u32 %s63, 1
        %s182 = smul.addr %s181, 128
        %s183 = scalar_lea.vmem [#allocation6], %s182
        %p184 = pneg %p76
        %p185 = pneg %p73
        %p186 = pneg %p104
        %p187 = pneg %p101
        %s188 = sand.u32 %s91, 1
        %s189 = scalar_lea.sflag [#allocation4], %s188
        %s190 = sand.u32 %s91, 1
        %s191 = smul.addr %s190, 128
        %s192 = scalar_lea.vmem [#allocation7], %s191
        %s193 = smul.u32 16, %s24
        %s194 = smul.u32 2, %s25
        %s195 = smul.u32 16, %s24
        %s196 = smul.u32 2, %s25
        %s197 = smul.u32 %s24, 2
        %s198 = smul.u32 %s25, 2
        %s199 = sadd.s32 %s197, %s198
        %s200 = sld [smem:[#allocation2 + %s199]]
        %v201 = vld [vmem:[%s171] sm:$0xf]
        %v202 = vld [vmem:[%s171 + $0x8] sm:$0xf]
        %v203 = vld [vmem:[%s171 + $0x10] sm:$0xf]
        %v204 = vld [vmem:[%s171 + $0x18] sm:$0xf]
        %v205 = vld [vmem:[%s171 + $0x20] sm:$0xf]
        %v206 = vld [vmem:[%s171 + $0x28] sm:$0xf]
        %v207 = vld [vmem:[%s171 + $0x30] sm:$0xf]
        %v208 = vld [vmem:[%s171 + $0x38] sm:$0xf]
        %v209 = vld [vmem:[%s171 + $0x40] sm:$0xf]
        %v210 = vld [vmem:[%s171 + $0x48] sm:$0xf]
        %v211 = vld [vmem:[%s171 + $0x50] sm:$0xf]
        %v212 = vld [vmem:[%s171 + $0x58] sm:$0xf]
        %v213 = vld [vmem:[%s171 + $0x60] sm:$0xf]
        %v214 = vld [vmem:[%s171 + $0x68] sm:$0xf]
        %v215 = vld [vmem:[%s171 + $0x70] sm:$0xf]
        %v216 = vld [vmem:[%s171 + $0x78] sm:$0xf]
        %v217 = vunpack.c.l.bf16 %v201
        %v218 = vunpack.c.l.bf16 %v202
        %v219 = vunpack.c.l.bf16 %v203
        %v220 = vunpack.c.l.bf16 %v204
        %v221 = vunpack.c.l.bf16 %v205
        %v222 = vunpack.c.l.bf16 %v206
        %v223 = vunpack.c.l.bf16 %v207
        %v224 = vunpack.c.l.bf16 %v208
        %v225 = vunpack.c.l.bf16 %v209
        %v226 = vunpack.c.l.bf16 %v210
        %v227 = vunpack.c.l.bf16 %v211
        %v228 = vunpack.c.l.bf16 %v212
        %v229 = vunpack.c.l.bf16 %v213
        %v230 = vunpack.c.l.bf16 %v214
        %v231 = vunpack.c.l.bf16 %v215
        %v232 = vunpack.c.l.bf16 %v216
        %v233 = vstv %s200
        %v234 = vmul.f32 %v217, %v233
        %v235 = vmul.f32 %v218, %v233
        %v236 = vmul.f32 %v219, %v233
        %v237 = vmul.f32 %v220, %v233
        %v238 = vmul.f32 %v221, %v233
        %v239 = vmul.f32 %v222, %v233
        %v240 = vmul.f32 %v223, %v233
        %v241 = vmul.f32 %v224, %v233
        %v242 = vmul.f32 %v225, %v233
        %v243 = vmul.f32 %v226, %v233
        %v244 = vmul.f32 %v227, %v233
        %v245 = vmul.f32 %v228, %v233
        %v246 = vmul.f32 %v229, %v233
        %v247 = vmul.f32 %v230, %v233
        %v248 = vmul.f32 %v231, %v233
        %v249 = vmul.f32 %v232, %v233
        %v250 = vpack.c.bf16 %v235, %v234
        %v251 = vpack.c.bf16 %v237, %v236
        %v252 = vpack.c.bf16 %v239, %v238
        %v253 = vpack.c.bf16 %v241, %v240
        %v254 = vpack.c.bf16 %v243, %v242
        %v255 = vpack.c.bf16 %v245, %v244
        %v256 = vpack.c.bf16 %v247, %v246
        %v257 = vpack.c.bf16 %v249, %v248
        %v266 = vunpack.c.l.b16 %v250
        %v267 = vunpack.c.h.b16 %v250
        %v268 = vunpack.c.l.b16 %v251
        %v269 = vunpack.c.h.b16 %v251
        %v270 = vunpack.c.l.b16 %v252
        %v271 = vunpack.c.h.b16 %v252
        %v272 = vunpack.c.l.b16 %v253
        %v273 = vunpack.c.h.b16 %v253
        %v274 = vunpack.c.l.b16 %v254
        %v275 = vunpack.c.h.b16 %v254
        %v276 = vunpack.c.l.b16 %v255
        %v277 = vunpack.c.h.b16 %v255
        %v278 = vunpack.c.l.b16 %v256
        %v279 = vunpack.c.h.b16 %v256
        %v280 = vunpack.c.l.b16 %v257
        %v281 = vunpack.c.h.b16 %v257
        %v282 = vpack.c.b16 %v266, %v266
        %v283 = vpack.c.b16 %v267, %v267
        %v284 = vpack.c.b16 %v268, %v268
        %v285 = vpack.c.b16 %v269, %v269
        %v286 = vpack.c.b16 %v270, %v270
        %v287 = vpack.c.b16 %v271, %v271
        %v288 = vpack.c.b16 %v272, %v272
        %v289 = vpack.c.b16 %v273, %v273
        %v290 = vpack.c.b16 %v274, %v274
        %v291 = vpack.c.b16 %v275, %v275
        %v292 = vpack.c.b16 %v276, %v276
        %v293 = vpack.c.b16 %v277, %v277
        %v294 = vpack.c.b16 %v278, %v278
        %v295 = vpack.c.b16 %v279, %v279
        %v296 = vpack.c.b16 %v280, %v280
        %v297 = vpack.c.b16 %v281, %v281
        %314 = vst [vmem:[%s192] sm:$0xf] %v282
        %315 = vst [vmem:[%s192 + $0x8] sm:$0xf] %v283
        %316 = vst [vmem:[%s192 + $0x10] sm:$0xf] %v284
        %317 = vst [vmem:[%s192 + $0x18] sm:$0xf] %v285
        %318 = vst [vmem:[%s192 + $0x20] sm:$0xf] %v286
        %319 = vst [vmem:[%s192 + $0x28] sm:$0xf] %v287
        %320 = vst [vmem:[%s192 + $0x30] sm:$0xf] %v288
        %321 = vst [vmem:[%s192 + $0x38] sm:$0xf] %v289
        %322 = vst [vmem:[%s192 + $0x40] sm:$0xf] %v290
        %323 = vst [vmem:[%s192 + $0x48] sm:$0xf] %v291
        %324 = vst [vmem:[%s192 + $0x50] sm:$0xf] %v292
        %325 = vst [vmem:[%s192 + $0x58] sm:$0xf] %v293
        %326 = vst [vmem:[%s192 + $0x60] sm:$0xf] %v294
        %327 = vst [vmem:[%s192 + $0x68] sm:$0xf] %v295
        %328 = vst [vmem:[%s192 + $0x70] sm:$0xf] %v296
        %329 = vst [vmem:[%s192 + $0x78] sm:$0xf] %v297
        %s330 = sadd.s32 %s199, 1
        %s331 = sld [smem:[#allocation2 + %s330]]
        %v332 = vld [vmem:[%s171 + $0x4] sm:$0xf]
        %v333 = vld [vmem:[%s171 + $0xc] sm:$0xf]
        %v334 = vld [vmem:[%s171 + $0x14] sm:$0xf]
        %v335 = vld [vmem:[%s171 + $0x1c] sm:$0xf]
        %v336 = vld [vmem:[%s171 + $0x24] sm:$0xf]
        %v337 = vld [vmem:[%s171 + $0x2c] sm:$0xf]
        %v338 = vld [vmem:[%s171 + $0x34] sm:$0xf]
        %v339 = vld [vmem:[%s171 + $0x3c] sm:$0xf]
        %v340 = vld [vmem:[%s171 + $0x44] sm:$0xf]
        %v341 = vld [vmem:[%s171 + $0x4c] sm:$0xf]
        %v342 = vld [vmem:[%s171 + $0x54] sm:$0xf]
        %v343 = vld [vmem:[%s171 + $0x5c] sm:$0xf]
        %v344 = vld [vmem:[%s171 + $0x64] sm:$0xf]
        %v345 = vld [vmem:[%s171 + $0x6c] sm:$0xf]
        %v346 = vld [vmem:[%s171 + $0x74] sm:$0xf]
        %v347 = vld [vmem:[%s171 + $0x7c] sm:$0xf]
        %v348 = vunpack.c.l.bf16 %v332
        %v349 = vunpack.c.l.bf16 %v333
        %v350 = vunpack.c.l.bf16 %v334
        %v351 = vunpack.c.l.bf16 %v335
        %v352 = vunpack.c.l.bf16 %v336
        %v353 = vunpack.c.l.bf16 %v337
        %v354 = vunpack.c.l.bf16 %v338
        %v355 = vunpack.c.l.bf16 %v339
        %v356 = vunpack.c.l.bf16 %v340
        %v357 = vunpack.c.l.bf16 %v341
        %v358 = vunpack.c.l.bf16 %v342
        %v359 = vunpack.c.l.bf16 %v343
        %v360 = vunpack.c.l.bf16 %v344
        %v361 = vunpack.c.l.bf16 %v345
        %v362 = vunpack.c.l.bf16 %v346
        %v363 = vunpack.c.l.bf16 %v347
        %v364 = vstv %s331
        %v365 = vmul.f32 %v348, %v364
        %v366 = vmul.f32 %v349, %v364
        %v367 = vmul.f32 %v350, %v364
        %v368 = vmul.f32 %v351, %v364
        %v369 = vmul.f32 %v352, %v364
        %v370 = vmul.f32 %v353, %v364
        %v371 = vmul.f32 %v354, %v364
        %v372 = vmul.f32 %v355, %v364
        %v373 = vmul.f32 %v356, %v364
        %v374 = vmul.f32 %v357, %v364
        %v375 = vmul.f32 %v358, %v364
        %v376 = vmul.f32 %v359, %v364
        %v377 = vmul.f32 %v360, %v364
        %v378 = vmul.f32 %v361, %v364
        %v379 = vmul.f32 %v362, %v364
        %v380 = vmul.f32 %v363, %v364
        %v381 = vpack.c.bf16 %v366, %v365
        %v382 = vpack.c.bf16 %v368, %v367
        %v383 = vpack.c.bf16 %v370, %v369
        %v384 = vpack.c.bf16 %v372, %v371
        %v385 = vpack.c.bf16 %v374, %v373
        %v386 = vpack.c.bf16 %v376, %v375
        %v387 = vpack.c.bf16 %v378, %v377
        %v388 = vpack.c.bf16 %v380, %v379
        %v397 = vunpack.c.l.b16 %v381
        %v398 = vunpack.c.h.b16 %v381
        %v399 = vunpack.c.l.b16 %v382
        %v400 = vunpack.c.h.b16 %v382
        %v401 = vunpack.c.l.b16 %v383
        %v402 = vunpack.c.h.b16 %v383
        %v403 = vunpack.c.l.b16 %v384
        %v404 = vunpack.c.h.b16 %v384
        %v405 = vunpack.c.l.b16 %v385
        %v406 = vunpack.c.h.b16 %v385
        %v407 = vunpack.c.l.b16 %v386
        %v408 = vunpack.c.h.b16 %v386
        %v409 = vunpack.c.l.b16 %v387
        %v410 = vunpack.c.h.b16 %v387
        %v411 = vunpack.c.l.b16 %v388
        %v412 = vunpack.c.h.b16 %v388
        %v413 = vpack.c.b16 %v397, %v397
        %v414 = vpack.c.b16 %v398, %v398
        %v415 = vpack.c.b16 %v399, %v399
        %v416 = vpack.c.b16 %v400, %v400
        %v417 = vpack.c.b16 %v401, %v401
        %v418 = vpack.c.b16 %v402, %v402
        %v419 = vpack.c.b16 %v403, %v403
        %v420 = vpack.c.b16 %v404, %v404
        %v421 = vpack.c.b16 %v405, %v405
        %v422 = vpack.c.b16 %v406, %v406
        %v423 = vpack.c.b16 %v407, %v407
        %v424 = vpack.c.b16 %v408, %v408
        %v425 = vpack.c.b16 %v409, %v409
        %v426 = vpack.c.b16 %v410, %v410
        %v427 = vpack.c.b16 %v411, %v411
        %v428 = vpack.c.b16 %v412, %v412
        %445 = vst [vmem:[%s192 + $0x4] sm:$0xf] %v413
        %446 = vst [vmem:[%s192 + $0xc] sm:$0xf] %v414
        %447 = vst [vmem:[%s192 + $0x14] sm:$0xf] %v415
        %448 = vst [vmem:[%s192 + $0x1c] sm:$0xf] %v416
        %449 = vst [vmem:[%s192 + $0x24] sm:$0xf] %v417
        %450 = vst [vmem:[%s192 + $0x2c] sm:$0xf] %v418
        %451 = vst [vmem:[%s192 + $0x34] sm:$0xf] %v419
        %452 = vst [vmem:[%s192 + $0x3c] sm:$0xf] %v420
        %453 = vst [vmem:[%s192 + $0x44] sm:$0xf] %v421
        %454 = vst [vmem:[%s192 + $0x4c] sm:$0xf] %v422
        %455 = vst [vmem:[%s192 + $0x54] sm:$0xf] %v423
        %456 = vst [vmem:[%s192 + $0x5c] sm:$0xf] %v424
        %457 = vst [vmem:[%s192 + $0x64] sm:$0xf] %v425
        %458 = vst [vmem:[%s192 + $0x6c] sm:$0xf] %v426
        %459 = vst [vmem:[%s192 + $0x74] sm:$0xf] %v427
        %460 = vst [vmem:[%s192 + $0x7c] sm:$0xf] %v428
        %s461 = sand.u32 %s91, 1
        %s462 = scalar_lea.sflag [#allocation4], %s461
        %s463 = sand.u32 %s91, 1
        %s464 = smul.addr %s463, 128
        %s465 = scalar_lea.vmem [#allocation7], %s464
        // Predicated region
        $region37: #{tpu_custom_call.1} parent=27 // pred_check
          %p466 = pneg %p101
        $region38: #{tpu_custom_call.1} parent=27 // pred_check_branch
          %468 = sbr.rel (%p466) target = $region40
        $region39: #{tpu_custom_call.1} parent=27 // pred_region
          %s469 = smul.u32 16, %s24
          %s470 = smul.u32 2, %s25
          %s472 = ssub.s32 2048, 2048
          %473 = vsyncadd %s462, %s472
          %s474 = smul.addr %s469, 2
          %s475 = sadd.s32 %s470, %s474
          %s476 = smul.addr %s475, 64
          %s477 = scalar_lea.hbm %s2, %s476
          %s478 = sshll.u32 %s465, 4
          %s479 = int_to_ptr.vmem [resolvable:$true] %s478
          %484 = dma.vmem_to_hbm [thread:$0]  %s479, 2048, %s477, %s462, 128, 128, 8
        $region40: #{tpu_custom_call.1} parent=27 // pred_fallthru
          _
      $region28: #{tpu_custom_call.1} parent=5 // pred_fallthru
        _
      %p485 = scmp.le.s32.totalorder 2, %s15
      // Predicated region
      $region41: #{tpu_custom_call.1} parent=5 // pred_check
        %p486 = pneg %p485
      $region42: #{tpu_custom_call.1} parent=5 // pred_check_branch
        %488 = sbr.rel (%p486) target = $region44
      $region43: #{tpu_custom_call.1} parent=5 // pred_region
        %s489 = ssub.s32 %s15, 2
        // Predicated region
        $region45: #{tpu_custom_call.1} parent=43 // pred_check
          %p490 = pneg %p107
        $region46: #{tpu_custom_call.1} parent=43 // pred_check_branch
          %492 = sbr.rel (%p490) target = $region48
        $region47: #{tpu_custom_call.1} parent=43 // pred_region
          %s493 = sand.u32 %s92, 1
          %s494 = scalar_lea.sflag [#allocation4], %s493
          %s495 = sand.u32 %s92, 1
          %s496 = smul.addr %s495, 128
          %s497 = scalar_lea.vmem [#allocation7], %s496
          %498 = dma.done %s494, 2048
        $region48: #{tpu_custom_call.1} parent=43 // pred_fallthru
          _
      $region44: #{tpu_custom_call.1} parent=5 // pred_fallthru
        _
    $region6: #{tpu_custom_call.1} parent=1 // loop_footer
      %s19 = sadd.s32 1, %s15
    $region7: #{tpu_custom_call.1} parent=1 // loop_footer_branch
      %14 = sbr.rel target = $region3
    $region8: #{tpu_custom_call.1} parent=1 // loop_exit
      _
    %499 = vsyncpa [#allocation3], 1
    %s500 = scalar_lea.sflag [#allocation3], 1
    %501 = vsyncpa %s500, 1
    %502 = vsyncpa [#allocation4], 1
    %s503 = scalar_lea.sflag [#allocation4], 1
    %504 = vsyncpa %s503, 1
    %505 = vsyncpa [#allocation5], 1
    %s506 = scalar_lea.sflag [#allocation5], 1
    %507 = vsyncpa %s506, 1

</llo_original>
